<compile_context>
chip_gen: v6e
topology: v6e:2x2x1
jax: 0.10.0
libtpu: 0.0.40
codegen_flags: <defaults>
</compile_context>

<pallas_src>
import jax
import jax.numpy as jnp
from jax.experimental import pallas as pl
from jax.experimental.pallas import tpu as pltpu

LANE = 128  # TPU lane width; all padded feature dims are multiples of this.


def _round_up(x, m):
    return ((x + m - 1) // m) * m


# ---------------------------------------------------------------------------
# Kernel
# ---------------------------------------------------------------------------
def critic_mlp_kernel(x_ref, w1_ref, b1_ref, w2_ref, b2_ref, w3_ref, b3_ref,
                      out_ref):
    # x_ref: (TB, KP) bf16  -- cat([state, action]) zero-padded to KP lanes.
    # w1_ref: (KP, H1P) bf16, w2_ref: (H1P, H2P) bf16 (zero-padded).
    # b1_ref/b2_ref: (1, H*P) f32; w3_ref: (1, H2P) f32 head row; b3_ref: (1, 128) f32.

    # Layer 1: single MXU matmul (concat already folded), f32 accumulate.
    h1 = jnp.dot(x_ref[...], w1_ref[...],
                 preferred_element_type=jnp.float32) + b1_ref[...]
    h1 = jnp.maximum(h1, 0.0)                                   # ReLU (f32 VPU)

    # Layer 2: bf16 MXU operands, f32 accumulate / bias / ReLU.
    h2 = jnp.dot(h1.astype(jnp.bfloat16), w2_ref[...],
                 preferred_element_type=jnp.float32) + b2_ref[...]
    h2 = jnp.maximum(h2, 0.0)

    # Head (fc2 -> 1): VPU multiply + XLU lane-reduce instead of a K=128,N=1
    # MXU push.  Padded columns of h2 and w3 are exactly zero, so the sum is
    # identical to the unpadded dot product.
    q = jnp.sum(h2 * w3_ref[...], axis=-1, keepdims=True)       # (TB, 1) f32

    # Lane-dense store: broadcast q across 128 lanes; wrapper slices col 0.
    out_ref[...] = jnp.broadcast_to(q, out_ref.shape) + b3_ref[...]


# ---------------------------------------------------------------------------
# Wrapper
# ---------------------------------------------------------------------------
def critic_forward(state, action, packed_params, *, batch_tile=512):
    """Run the critic MLP; returns (B, 1) f32 Q-values."""
    w1p, b1p, w2p, b2p, w3p, b3p = packed_params
    B, S = state.shape
    A = action.shape[1]
    kp, h1p = w1p.shape
    h2p = w2p.shape[1]

    # Batch tile: multiple of 8, capped by the (padded) batch size.
    tb = _round_up(min(batch_tile, _round_up(B, 8)), 8)
    b_pad = _round_up(B, tb)
    grid = (b_pad // tb,)

    # Fold the concat: one zero-padded, lane-dense bf16 input slab.
    x = jnp.zeros((b_pad, kp), jnp.float32)
    x = x.at[:B, :S].set(state)
    x = x.at[:B, S:S + A].set(action)
    x = x.astype(jnp.bfloat16)

    cost = pl.CostEstimate(
        flops=2 * b_pad * (kp * h1p + h1p * h2p + h2p),
        transcendentals=0,
        bytes_accessed=(x.size * 2 + b_pad * LANE * 4
                        + (w1p.size + w2p.size) * 2
                        + (b1p.size + b2p.size + w3p.size + b3p.size) * 4),
    )

    out = pl.pallas_call(
        critic_mlp_kernel,
        out_shape=jax.ShapeDtypeStruct((b_pad, LANE), jnp.float32),
        grid=grid,
        in_specs=[
            pl.BlockSpec((tb, kp), lambda i: (i, 0)),      # input tile (pipelined)
            pl.BlockSpec((kp, h1p), lambda i: (0, 0)),     # W1 (VMEM-resident)
            pl.BlockSpec((1, h1p), lambda i: (0, 0)),      # b1
            pl.BlockSpec((h1p, h2p), lambda i: (0, 0)),    # W2
            pl.BlockSpec((1, h2p), lambda i: (0, 0)),      # b2
            pl.BlockSpec((1, h2p), lambda i: (0, 0)),      # w3 head row
            pl.BlockSpec((1, LANE), lambda i: (0, 0)),     # b3 broadcast row
        ],
        out_specs=pl.BlockSpec((tb, LANE), lambda i: (i, 0)),
        compiler_params=pltpu.CompilerParams(
            dimension_semantics=("parallel",)),            # megacore on v7x
        cost_estimate=cost,
    )(x, w1p, b1p, w2p, b2p, w3p, b3p)

    return out[:B, :1]


# ---------------------------------------------------------------------------
# Parameter init / packing / reference
# ---------------------------------------------------------------------------
def init_critic_params(key, state_space, action_space, fc1_dims, fc2_dims,
                       init_w=0.003):
    """Raw f32 params, weights stored as (in_features, out_features)."""
    d_in = state_space + action_space
    k = jax.random.split(key, 6)

    def lin(kw, kb, fan_in, fan_out, bound):
        w = jax.random.uniform(kw, (fan_in, fan_out), jnp.float32, -bound, bound)
        b = jax.random.uniform(kb, (fan_out,), jnp.float32, -bound, bound)
        return w, b

    w1, b1 = lin(k[0], k[1], d_in, fc1_dims, 1.0 / (d_in ** 0.5))
    w2, b2 = lin(k[2], k[3], fc1_dims, fc2_dims, 1.0 / (fc1_dims ** 0.5))
    w3, b3 = lin(k[4], k[5], fc2_dims, 1, float(init_w))
    return (w1, b1, w2, b2, w3, b3)


def pack_critic_params(raw_params):
    """Zero-pad feature dims to 128 and cast matmul weights to bf16."""
    w1, b1, w2, b2, w3, b3 = raw_params
    d_in, fc1 = w1.shape
    fc2 = w2.shape[1]
    kp, h1p, h2p = (_round_up(d, LANE) for d in (d_in, fc1, fc2))

    w1p = jnp.zeros((kp, h1p), jnp.float32).at[:d_in, :fc1].set(w1).astype(jnp.bfloat16)
    b1p = jnp.zeros((1, h1p), jnp.float32).at[0, :fc1].set(b1)
    w2p = jnp.zeros((h1p, h2p), jnp.float32).at[:fc1, :fc2].set(w2).astype(jnp.bfloat16)
    b2p = jnp.zeros((1, h2p), jnp.float32).at[0, :fc2].set(b2)
    w3p = jnp.zeros((1, h2p), jnp.float32).at[0, :fc2].set(w3[:, 0])   # f32 (VPU head)
    b3p = jnp.full((1, LANE), b3[0], jnp.float32)
    return (w1p, b1p, w2p, b2p, w3p, b3p)


def critic_reference(state, action, raw_params):
    """Pure-JAX f32 reference matching the PyTorch forward exactly."""
    w1, b1, w2, b2, w3, b3 = raw_params
    x = jnp.concatenate([state, action], axis=1)
    h1 = jax.nn.relu(x @ w1 + b1)
    h2 = jax.nn.relu(h1 @ w2 + b2)
    return h2 @ w3 + b3


# ---------------------------------------------------------------------------
# Demo / correctness check
# ---------------------------------------------------------------------------
if __name__ == "__main__":
    B = 48                 # small batch; batch_tile=16 -> grid=(3,) exercises pipeline
    STATE_SPACE = 12
    ACTION_SPACE = 4
    FC1 = 32
    FC2 = 32

    key = jax.random.PRNGKey(0)
    k_state, k_action, k_params = jax.random.split(key, 3)

    state = jax.random.normal(k_state, (B, STATE_SPACE), jnp.float32)
    action = jax.random.normal(k_action, (B, ACTION_SPACE), jnp.float32)

    raw_params = init_critic_params(k_params, STATE_SPACE, ACTION_SPACE, FC1, FC2)
    packed_params = pack_critic_params(raw_params)

    q = critic_forward(state, action, packed_params, batch_tile=16)
    q = jax.block_until_ready(q)

    q_ref = critic_reference(state, action, raw_params)
    assert q.shape == (B, 1), q.shape
    # bf16 MXU operands vs f32 reference -> loosened tolerance (per review note).
    max_err = jnp.max(jnp.abs(q - q_ref))
    assert jnp.allclose(q, q_ref, atol=1e-2, rtol=1e-2), (max_err, q[:4], q_ref[:4])

    print("KERNEL_OK")
</pallas_src>

<mosaic_0001>
module attributes {stable_mosaic.version = 11 : i64} {
  func.func @critic_mlp_kernel(%arg0: i32, %arg1: memref<16x128xbf16, #tpu.memory_space<vmem>>, %arg2: memref<128x128xbf16, #tpu.memory_space<vmem>>, %arg3: memref<1x128xf32, #tpu.memory_space<vmem>>, %arg4: memref<128x128xbf16, #tpu.memory_space<vmem>>, %arg5: memref<1x128xf32, #tpu.memory_space<vmem>>, %arg6: memref<1x128xf32, #tpu.memory_space<vmem>>, %arg7: memref<1x128xf32, #tpu.memory_space<vmem>>, %arg8: memref<16x128xf32, #tpu.memory_space<vmem>>) attributes {dimension_semantics = [#tpu.dimension_semantics<parallel>], iteration_bounds = array<i64: 3>, scalar_prefetch = 0 : i64, scratch_operands = 0 : i64, tpu.core_type = #tpu.core_type<tc>, window_params = [{transform_indices = @transform_0, window_bounds = array<i64: 16, 128>}, {pipeline_mode = #tpu.pipeline_mode<synchronous>, transform_indices = @transform_1, window_bounds = array<i64: 128, 128>}, {pipeline_mode = #tpu.pipeline_mode<synchronous>, transform_indices = @transform_2, window_bounds = array<i64: 1, 128>}, {pipeline_mode = #tpu.pipeline_mode<synchronous>, transform_indices = @transform_3, window_bounds = array<i64: 128, 128>}, {pipeline_mode = #tpu.pipeline_mode<synchronous>, transform_indices = @transform_4, window_bounds = array<i64: 1, 128>}, {pipeline_mode = #tpu.pipeline_mode<synchronous>, transform_indices = @transform_5, window_bounds = array<i64: 1, 128>}, {pipeline_mode = #tpu.pipeline_mode<synchronous>, transform_indices = @transform_6, window_bounds = array<i64: 1, 128>}, {transform_indices = @transform_7, window_bounds = array<i64: 16, 128>}]} {
    %c0 = arith.constant 0 : index
    %c0_0 = arith.constant 0 : index
    %0 = vector.load %arg1[%c0, %c0_0] : memref<16x128xbf16, #tpu.memory_space<vmem>>, vector<16x128xbf16>
    %c0_1 = arith.constant 0 : index
    %c0_2 = arith.constant 0 : index
    %1 = vector.load %arg2[%c0_1, %c0_2] : memref<128x128xbf16, #tpu.memory_space<vmem>>, vector<128x128xbf16>
    %cst = arith.constant dense<0.000000e+00> : vector<16x128xf32>
    %2 = tpu.matmul %0, %1, %cst {dimension_numbers = #tpu.dot_dimension_numbers<[1], [0], [0], [1], [0, 0, 1, 1], [], []>} : vector<16x128xbf16>, vector<128x128xbf16>, vector<16x128xf32> -> vector<16x128xf32>
    %c0_3 = arith.constant 0 : index
    %c0_4 = arith.constant 0 : index
    %3 = vector.load %arg3[%c0_3, %c0_4] : memref<1x128xf32, #tpu.memory_space<vmem>>, vector<1x128xf32>
    %4 = vector.broadcast %3 : vector<1x128xf32> to vector<16x128xf32>
    %5 = arith.addf %2, %4 : vector<16x128xf32>
    %cst_5 = arith.constant 0.000000e+00 : f32
    %6 = vector.broadcast %cst_5 : f32 to vector<16x128xf32>
    %7 = arith.maximumf %5, %6 : vector<16x128xf32>
    %8 = arith.truncf %7 : vector<16x128xf32> to vector<16x128xbf16>
    %c0_6 = arith.constant 0 : index
    %c0_7 = arith.constant 0 : index
    %9 = vector.load %arg4[%c0_6, %c0_7] : memref<128x128xbf16, #tpu.memory_space<vmem>>, vector<128x128xbf16>
    %cst_8 = arith.constant dense<0.000000e+00> : vector<16x128xf32>
    %10 = tpu.matmul %8, %9, %cst_8 {dimension_numbers = #tpu.dot_dimension_numbers<[1], [0], [0], [1], [0, 0, 1, 1], [], []>} : vector<16x128xbf16>, vector<128x128xbf16>, vector<16x128xf32> -> vector<16x128xf32>
    %c0_9 = arith.constant 0 : index
    %c0_10 = arith.constant 0 : index
    %11 = vector.load %arg5[%c0_9, %c0_10] : memref<1x128xf32, #tpu.memory_space<vmem>>, vector<1x128xf32>
    %12 = vector.broadcast %11 : vector<1x128xf32> to vector<16x128xf32>
    %13 = arith.addf %10, %12 : vector<16x128xf32>
    %cst_11 = arith.constant 0.000000e+00 : f32
    %14 = vector.broadcast %cst_11 : f32 to vector<16x128xf32>
    %15 = arith.maximumf %13, %14 : vector<16x128xf32>
    %c0_12 = arith.constant 0 : index
    %c0_13 = arith.constant 0 : index
    %16 = vector.load %arg6[%c0_12, %c0_13] : memref<1x128xf32, #tpu.memory_space<vmem>>, vector<1x128xf32>
    %17 = vector.broadcast %16 : vector<1x128xf32> to vector<16x128xf32>
    %18 = arith.mulf %15, %17 : vector<16x128xf32>
    %cst_14 = arith.constant dense<0.000000e+00> : vector<16xf32>
    %19 = vector.multi_reduction <add>, %18, %cst_14 [1] : vector<16x128xf32> to vector<16xf32>
    %20 = vector.shape_cast %19 : vector<16xf32> to vector<16x1xf32>
    %21 = vector.shape_cast %20 : vector<16x1xf32> to vector<16x1xf32>
    %22 = vector.broadcast %21 : vector<16x1xf32> to vector<16x128xf32>
    %c0_15 = arith.constant 0 : index
    %c0_16 = arith.constant 0 : index
    %23 = vector.load %arg7[%c0_15, %c0_16] : memref<1x128xf32, #tpu.memory_space<vmem>>, vector<1x128xf32>
    %24 = vector.broadcast %23 : vector<1x128xf32> to vector<16x128xf32>
    %25 = arith.addf %22, %24 : vector<16x128xf32>
    %c0_17 = arith.constant 0 : index
    %c0_18 = arith.constant 0 : index
    %26 = vector.load %arg8[%c0_17, %c0_18] : memref<16x128xf32, #tpu.memory_space<vmem>>, vector<16x128xf32>
    tpu.vector_store %arg8[%c0_17, %c0_18], %25 {strides = array<i32>} : memref<16x128xf32, #tpu.memory_space<vmem>>, vector<16x128xf32>,
    return
  }
  func.func @transform_0(%arg0: i32) -> (i32, i32) {
    %c0_i32 = arith.constant 0 : i32
    %c0_i32_0 = arith.constant 0 : i32
    return %arg0, %c0_i32 : i32, i32
  }
  func.func @transform_1(%arg0: i32) -> (i32, i32) {
    %c0_i32 = arith.constant 0 : i32
    %c0_i32_0 = arith.constant 0 : i32
    %c0_i32_1 = arith.constant 0 : i32
    return %c0_i32, %c0_i32_0 : i32, i32
  }
  func.func @transform_2(%arg0: i32) -> (i32, i32) {
    %c0_i32 = arith.constant 0 : i32
    %c0_i32_0 = arith.constant 0 : i32
    %c0_i32_1 = arith.constant 0 : i32
    return %c0_i32, %c0_i32_0 : i32, i32
  }
  func.func @transform_3(%arg0: i32) -> (i32, i32) {
    %c0_i32 = arith.constant 0 : i32
    %c0_i32_0 = arith.constant 0 : i32
    %c0_i32_1 = arith.constant 0 : i32
    return %c0_i32, %c0_i32_0 : i32, i32
  }
  func.func @transform_4(%arg0: i32) -> (i32, i32) {
    %c0_i32 = arith.constant 0 : i32
    %c0_i32_0 = arith.constant 0 : i32
    %c0_i32_1 = arith.constant 0 : i32
    return %c0_i32, %c0_i32_0 : i32, i32
  }
  func.func @transform_5(%arg0: i32) -> (i32, i32) {
    %c0_i32 = arith.constant 0 : i32
    %c0_i32_0 = arith.constant 0 : i32
    %c0_i32_1 = arith.constant 0 : i32
    return %c0_i32, %c0_i32_0 : i32, i32
  }
  func.func @transform_6(%arg0: i32) -> (i32, i32) {
    %c0_i32 = arith.constant 0 : i32
    %c0_i32_0 = arith.constant 0 : i32
    %c0_i32_1 = arith.constant 0 : i32
    return %c0_i32, %c0_i32_0 : i32, i32
  }
  func.func @transform_7(%arg0: i32) -> (i32, i32) {
    %c0_i32 = arith.constant 0 : i32
    %c0_i32_0 = arith.constant 0 : i32
    return %arg0, %c0_i32 : i32, i32
  }
}

</mosaic_0001>

<llo_original>
// kernel: tpu_custom_call.1
$region0: #{tpu_custom_call.1}
  #allocation0 [shape = 'u32[]', space=smem, size = 0x4, offset = 0x4, fixed_abs, tag = 'smem constant byte address 0x4 - core index']
  #allocation1 [shape = 'u32[144,128]{1,0:T(1,128)}', space=vmem, size = 0x12000, scoped, tag = 'internal scratch']
  %s0 = inlined_call_operand.hbm [shape: bf16[48,128], index: 0, kind: input, shape index: {}]
  %s1 = inlined_call_operand.hbm [shape: bf16[128,128], index: 1, kind: input, shape index: {}]
  %s2 = inlined_call_operand.vmem [shape: f32[1,128], index: 2, kind: input, shape index: {}]
  %s3 = inlined_call_operand.hbm [shape: bf16[128,128], index: 3, kind: input, shape index: {}]
  %s4 = inlined_call_operand.vmem [shape: f32[1,128], index: 4, kind: input, shape index: {}]
  %s5 = inlined_call_operand.vmem [shape: f32[1,128], index: 5, kind: input, shape index: {}]
  %s6 = inlined_call_operand.vmem [shape: f32[1,128], index: 6, kind: input, shape index: {}]
  %s7 = inlined_call_operand.hbm [shape: f32[48,128], index: 7, kind: output, shape index: {}]
  %s8 = sld [smem:[#allocation0]]
  $region73: #{tpu_custom_call.1} parent=0
    _
  %s10 = ssub.s32 1, %s8
  %s11 = scalar_select 0, %s10, %s8
  $region1: #{tpu_custom_call.1} parent=0
    #allocation2 [shape = 'u8[8192]{0}', space=vmem, size = 0x2000, scoped, tag = 'input window, operand 0']
    #allocation3 [shape = 's32[2]{0}', space=sflag, size = 0x8, scoped, tag = 'scoped memory for tpu_custom_call.1']
    #allocation4 [shape = 's32[2]{0}', space=sflag, size = 0x8, scoped, tag = 'scoped memory for tpu_custom_call.1']
    #allocation5 [shape = 'u8[32768]{0}', space=vmem, size = 0x8000, scoped, tag = 'input window, operand 1, single buffered']
    #allocation6 [shape = 's32[1]{0}', space=sflag, size = 0x4, scoped, tag = 'scoped memory for tpu_custom_call.1']
    #allocation7 [shape = 'u8[32768]{0}', space=vmem, size = 0x8000, scoped, tag = 'input window, operand 3, single buffered']
    #allocation8 [shape = 'u8[16384]{0}', space=vmem, size = 0x4000, scoped, tag = 'output window, operand 0']
    %12 = vsyncpa [#allocation3], 0
    %s13 = scalar_lea.sflag [#allocation3], 1
    %14 = vsyncpa %s13, 0
    %15 = vsyncpa [#allocation6], 0
    %16 = vsyncpa [#allocation4], 0
    %s17 = scalar_lea.sflag [#allocation4], 1
    %18 = vsyncpa %s17, 0
    loop: start=0, step=1, limit=5
    $region2: #{tpu_custom_call.1} parent=1 // loop_pre_header
      _
    $region3: #{tpu_custom_call.1} parent=1 // loop_header
      %s20 = sphi 0, %s24
      %p21 = scmp.ge.s32.totalorder %s20, 5
      %s30 = sphi 0, %s32
      %s33 = sphi 0, %s30
      %s34 = sphi 0, %s33
      %s50 = sphi 0, %s34
      %s54 = sphi 0, %s54
      %s56 = sphi 0, %s54
      %s57 = sphi 0, %s56
      %s71 = sphi 0, %s57
      %s75 = sphi 0, %s75
      %s77 = sphi 0, %s75
      %s78 = sphi 0, %s77
      %s92 = sphi 0, %s78
      %s96 = sphi 0, %s96
      %s98 = sphi 0, %s96
      %s99 = sphi 0, %s98
      %s113 = sphi 0, %s99
      %s117 = sphi 0, %s117
      %s119 = sphi 0, %s117
      %s120 = sphi 0, %s119
      %s134 = sphi 0, %s120
      %s138 = sphi 0, %s138
      %s140 = sphi 0, %s138
      %s141 = sphi 0, %s140
      %s155 = sphi 0, %s141
      %s159 = sphi 0, %s159
      %s161 = sphi 0, %s159
      %s162 = sphi 0, %s161
      %s176 = sphi 0, %s162
      %s182 = sphi 0, %s184
      %s185 = sphi 0, %s182
      %s186 = sphi 0, %s185
      %s202 = sphi 0, %s186
    $region4: #{tpu_custom_call.1} parent=1 // loop_header_branch
      %23 = sbr.rel (%p21) target = $region8
    $region5: #{tpu_custom_call.1} parent=1 // loop_body
      %s25 = ssub.s32 %s20, 1
      %s26 = ssub.s32 %s20, 2
      %s27 = sadd.s32 %s20, 1
      %s28 = ssub.s32 %s20, %s27
      %p29 = scmp.eq.s32.totalorder %s28, 0
      %s31 = sadd.s32 %s30, 1
      %s32 = scalar_select %p29, %s30, %s31
      %p35 = pneg %p29
      %p36 = scmp.eq.s32.totalorder %s20, 2
      %p37 = por %p35, %p36
      %p38 = scmp.ne.s32.totalorder %s30, %s33
      %p39 = scmp.eq.s32.totalorder %s20, 0
      %p40 = por %p38, %p39
      %p41 = scmp.ne.s32.totalorder %s30, %s33
      %p42 = scmp.eq.s32.totalorder %s25, 2
      %p43 = por %p41, %p42
      %p44 = scmp.ne.s32.totalorder %s33, %s34
      %p45 = scmp.eq.s32.totalorder %s25, 0
      %p46 = por %p44, %p45
      %p47 = scmp.ne.s32.totalorder %s33, %s34
      %p48 = scmp.eq.s32.totalorder %s26, 2
      %p49 = por %p47, %p48
      %p51 = scmp.ne.s32.totalorder %s34, %s50
      %p52 = scmp.eq.s32.totalorder %s26, 0
      %p53 = por %p51, %p52
      %s55 = sadd.s32 %s54, 1
      %p58 = scmp.eq.s32.totalorder %s20, 2
      %p59 = scmp.ne.s32.totalorder %s54, %s56
      %p60 = scmp.eq.s32.totalorder %s20, 0
      %p61 = por %p59, %p60
      %p62 = scmp.ne.s32.totalorder %s54, %s56
      %p63 = scmp.eq.s32.totalorder %s25, 2
      %p64 = por %p62, %p63
      %p65 = scmp.ne.s32.totalorder %s56, %s57
      %p66 = scmp.eq.s32.totalorder %s25, 0
      %p67 = por %p65, %p66
      %p68 = scmp.ne.s32.totalorder %s56, %s57
      %p69 = scmp.eq.s32.totalorder %s26, 2
      %p70 = por %p68, %p69
      %p72 = scmp.ne.s32.totalorder %s57, %s71
      %p73 = scmp.eq.s32.totalorder %s26, 0
      %p74 = por %p72, %p73
      %s76 = sadd.s32 %s75, 1
      %p79 = scmp.eq.s32.totalorder %s20, 2
      %p80 = scmp.ne.s32.totalorder %s75, %s77
      %p81 = scmp.eq.s32.totalorder %s20, 0
      %p82 = por %p80, %p81
      %p83 = scmp.ne.s32.totalorder %s75, %s77
      %p84 = scmp.eq.s32.totalorder %s25, 2
      %p85 = por %p83, %p84
      %p86 = scmp.ne.s32.totalorder %s77, %s78
      %p87 = scmp.eq.s32.totalorder %s25, 0
      %p88 = por %p86, %p87
      %p89 = scmp.ne.s32.totalorder %s77, %s78
      %p90 = scmp.eq.s32.totalorder %s26, 2
      %p91 = por %p89, %p90
      %p93 = scmp.ne.s32.totalorder %s78, %s92
      %p94 = scmp.eq.s32.totalorder %s26, 0
      %p95 = por %p93, %p94
      %s97 = sadd.s32 %s96, 1
      %p100 = scmp.eq.s32.totalorder %s20, 2
      %p101 = scmp.ne.s32.totalorder %s96, %s98
      %p102 = scmp.eq.s32.totalorder %s20, 0
      %p103 = por %p101, %p102
      %p104 = scmp.ne.s32.totalorder %s96, %s98
      %p105 = scmp.eq.s32.totalorder %s25, 2
      %p106 = por %p104, %p105
      %p107 = scmp.ne.s32.totalorder %s98, %s99
      %p108 = scmp.eq.s32.totalorder %s25, 0
      %p109 = por %p107, %p108
      %p110 = scmp.ne.s32.totalorder %s98, %s99
      %p111 = scmp.eq.s32.totalorder %s26, 2
      %p112 = por %p110, %p111
      %p114 = scmp.ne.s32.totalorder %s99, %s113
      %p115 = scmp.eq.s32.totalorder %s26, 0
      %p116 = por %p114, %p115
      %s118 = sadd.s32 %s117, 1
      %p121 = scmp.eq.s32.totalorder %s20, 2
      %p122 = scmp.ne.s32.totalorder %s117, %s119
      %p123 = scmp.eq.s32.totalorder %s20, 0
      %p124 = por %p122, %p123
      %p125 = scmp.ne.s32.totalorder %s117, %s119
      %p126 = scmp.eq.s32.totalorder %s25, 2
      %p127 = por %p125, %p126
      %p128 = scmp.ne.s32.totalorder %s119, %s120
      %p129 = scmp.eq.s32.totalorder %s25, 0
      %p130 = por %p128, %p129
      %p131 = scmp.ne.s32.totalorder %s119, %s120
      %p132 = scmp.eq.s32.totalorder %s26, 2
      %p133 = por %p131, %p132
      %p135 = scmp.ne.s32.totalorder %s120, %s134
      %p136 = scmp.eq.s32.totalorder %s26, 0
      %p137 = por %p135, %p136
      %s139 = sadd.s32 %s138, 1
      %p142 = scmp.eq.s32.totalorder %s20, 2
      %p143 = scmp.ne.s32.totalorder %s138, %s140
      %p144 = scmp.eq.s32.totalorder %s20, 0
      %p145 = por %p143, %p144
      %p146 = scmp.ne.s32.totalorder %s138, %s140
      %p147 = scmp.eq.s32.totalorder %s25, 2
      %p148 = por %p146, %p147
      %p149 = scmp.ne.s32.totalorder %s140, %s141
      %p150 = scmp.eq.s32.totalorder %s25, 0
      %p151 = por %p149, %p150
      %p152 = scmp.ne.s32.totalorder %s140, %s141
      %p153 = scmp.eq.s32.totalorder %s26, 2
      %p154 = por %p152, %p153
      %p156 = scmp.ne.s32.totalorder %s141, %s155
      %p157 = scmp.eq.s32.totalorder %s26, 0
      %p158 = por %p156, %p157
      %s160 = sadd.s32 %s159, 1
      %p163 = scmp.eq.s32.totalorder %s20, 2
      %p164 = scmp.ne.s32.totalorder %s159, %s161
      %p165 = scmp.eq.s32.totalorder %s20, 0
      %p166 = por %p164, %p165
      %p167 = scmp.ne.s32.totalorder %s159, %s161
      %p168 = scmp.eq.s32.totalorder %s25, 2
      %p169 = por %p167, %p168
      %p170 = scmp.ne.s32.totalorder %s161, %s162
      %p171 = scmp.eq.s32.totalorder %s25, 0
      %p172 = por %p170, %p171
      %p173 = scmp.ne.s32.totalorder %s161, %s162
      %p174 = scmp.eq.s32.totalorder %s26, 2
      %p175 = por %p173, %p174
      %p177 = scmp.ne.s32.totalorder %s162, %s176
      %p178 = scmp.eq.s32.totalorder %s26, 0
      %p179 = por %p177, %p178
      %s180 = ssub.s32 %s20, %s27
      %p181 = scmp.eq.s32.totalorder %s180, 0
      %s183 = sadd.s32 %s182, 1
      %s184 = scalar_select %p181, %s182, %s183
      %p187 = pneg %p181
      %p188 = scmp.eq.s32.totalorder %s20, 2
      %p189 = por %p187, %p188
      %p190 = scmp.ne.s32.totalorder %s182, %s185
      %p191 = scmp.eq.s32.totalorder %s20, 0
      %p192 = por %p190, %p191
      %p193 = scmp.ne.s32.totalorder %s182, %s185
      %p194 = scmp.eq.s32.totalorder %s25, 2
      %p195 = por %p193, %p194
      %p196 = scmp.ne.s32.totalorder %s185, %s186
      %p197 = scmp.eq.s32.totalorder %s25, 0
      %p198 = por %p196, %p197
      %p199 = scmp.ne.s32.totalorder %s185, %s186
      %p200 = scmp.eq.s32.totalorder %s26, 2
      %p201 = por %p199, %p200
      %p203 = scmp.ne.s32.totalorder %s186, %s202
      %p204 = scmp.eq.s32.totalorder %s26, 0
      %p205 = por %p203, %p204
      %p206 = scmp.le.s32.totalorder 1, %s20
      %p207 = scmp.lt.s32.totalorder %s20, 4
      %p208 = pnand %p206, %p207
      %p209 = pneg %p208
      // Predicated region
      $region9: #{tpu_custom_call.1} parent=5 // pred_check
        _
      $region10: #{tpu_custom_call.1} parent=5 // pred_check_branch
        %211 = sbr.rel (%p208) target = $region12
      $region11: #{tpu_custom_call.1} parent=5 // pred_region
        %s212 = ssub.s32 %s20, 1
        // Predicated region
        $region13: #{tpu_custom_call.1} parent=11 // pred_check
          %p213 = pneg %p67
        $region14: #{tpu_custom_call.1} parent=11 // pred_check_branch
          %215 = sbr.rel (%p213) target = $region16
        $region15: #{tpu_custom_call.1} parent=11 // pred_region
          %s217 = ssub.s32 1024, 1024
          %218 = vsyncadd [#allocation6], %s217
          %s219 = sshll.u32 [#allocation5], 4
          %s220 = int_to_ptr.vmem [resolvable:$true] %s219
          %225 = dma.hbm_to_vmem [thread:$0]  %s1, 1024, %s220, [#allocation6], 64, 64, 4
        $region16: #{tpu_custom_call.1} parent=11 // pred_fallthru
          _
        // Predicated region
        $region17: #{tpu_custom_call.1} parent=11 // pred_check
          %p226 = pneg %p88
        $region18: #{tpu_custom_call.1} parent=11 // pred_check_branch
          %228 = sbr.rel (%p226) target = $region20
        $region19: #{tpu_custom_call.1} parent=11 // pred_region
          _
        $region20: #{tpu_custom_call.1} parent=11 // pred_fallthru
          _
        // Predicated region
        $region21: #{tpu_custom_call.1} parent=11 // pred_check
          %p229 = pneg %p109
        $region22: #{tpu_custom_call.1} parent=11 // pred_check_branch
          %231 = sbr.rel (%p229) target = $region24
        $region23: #{tpu_custom_call.1} parent=11 // pred_region
          %s233 = ssub.s32 1024, 1024
          %234 = vsyncadd [#allocation6], %s233
          %s235 = sshll.u32 [#allocation7], 4
          %s236 = int_to_ptr.vmem [resolvable:$true] %s235
          %241 = dma.hbm_to_vmem [thread:$0]  %s3, 1024, %s236, [#allocation6], 64, 64, 4
        $region24: #{tpu_custom_call.1} parent=11 // pred_fallthru
          _
        // Predicated region
        $region25: #{tpu_custom_call.1} parent=11 // pred_check
          %p242 = pneg %p130
        $region26: #{tpu_custom_call.1} parent=11 // pred_check_branch
          %244 = sbr.rel (%p242) target = $region28
        $region27: #{tpu_custom_call.1} parent=11 // pred_region
          _
        $region28: #{tpu_custom_call.1} parent=11 // pred_fallthru
          _
        // Predicated region
        $region29: #{tpu_custom_call.1} parent=11 // pred_check
          %p245 = pneg %p151
        $region30: #{tpu_custom_call.1} parent=11 // pred_check_branch
          %247 = sbr.rel (%p245) target = $region32
        $region31: #{tpu_custom_call.1} parent=11 // pred_region
          _
        $region32: #{tpu_custom_call.1} parent=11 // pred_fallthru
          _
        // Predicated region
        $region33: #{tpu_custom_call.1} parent=11 // pred_check
          %p248 = pneg %p172
        $region34: #{tpu_custom_call.1} parent=11 // pred_check_branch
          %250 = sbr.rel (%p248) target = $region36
        $region35: #{tpu_custom_call.1} parent=11 // pred_region
          _
        $region36: #{tpu_custom_call.1} parent=11 // pred_fallthru
          _
      $region12: #{tpu_custom_call.1} parent=5 // pred_fallthru
        _
      %p251 = scmp.lt.s32.totalorder %s20, 3
      // Predicated region
      $region37: #{tpu_custom_call.1} parent=5 // pred_check
        %p252 = pneg %p251
      $region38: #{tpu_custom_call.1} parent=5 // pred_check_branch
        %254 = sbr.rel (%p252) target = $region40
      $region39: #{tpu_custom_call.1} parent=5 // pred_region
        // Predicated region
        $region41: #{tpu_custom_call.1} parent=39 // pred_check
          %p255 = pneg %p40
        $region42: #{tpu_custom_call.1} parent=39 // pred_check_branch
          %257 = sbr.rel (%p255) target = $region44
        $region43: #{tpu_custom_call.1} parent=39 // pred_region
          %s258 = sand.u32 %s30, 1
          %s259 = scalar_lea.sflag [#allocation3], %s258
          %s260 = sand.u32 %s30, 1
          %s261 = smul.addr %s260, 8
          %s262 = scalar_lea.vmem [#allocation2], %s261
          %s263 = smul.u32 2, %s20
          %s265 = ssub.s32 128, 128
          %266 = vsyncadd %s259, %s265
          %s267 = smul.addr %s263, 64
          %s268 = scalar_lea.hbm %s0, %s267
          %s269 = sshll.u32 %s262, 4
          %s270 = int_to_ptr.vmem [resolvable:$true] %s269
          %275 = dma.hbm_to_vmem [thread:$0]  %s268, 128, %s270, %s259, 64, 64, 4
        $region44: #{tpu_custom_call.1} parent=39 // pred_fallthru
          _
      $region40: #{tpu_custom_call.1} parent=5 // pred_fallthru
        _
      %p276 = scmp.le.s32.totalorder 1, %s20
      %p277 = scmp.lt.s32.totalorder %s20, 4
      %p278 = pnand %p276, %p277
      %p279 = pneg %p278
      // Predicated region
      $region45: #{tpu_custom_call.1} parent=5 // pred_check
        _
      $region46: #{tpu_custom_call.1} parent=5 // pred_check_branch
        %281 = sbr.rel (%p278) target = $region48
      $region47: #{tpu_custom_call.1} parent=5 // pred_region
        %s282 = ssub.s32 %s20, 1
        %s283 = sand.u32 %s33, 1
        %s284 = scalar_lea.sflag [#allocation3], %s283
        %s285 = sand.u32 %s33, 1
        %s286 = smul.addr %s285, 8
        %s287 = scalar_lea.vmem [#allocation2], %s286
        // Predicated region
        $region49: #{tpu_custom_call.1} parent=47 // pred_check
          %p288 = pneg %p46
        $region50: #{tpu_custom_call.1} parent=47 // pred_check_branch
          %290 = sbr.rel (%p288) target = $region52
        $region51: #{tpu_custom_call.1} parent=47 // pred_region
          %291 = dma.done %s284, 128
        $region52: #{tpu_custom_call.1} parent=47 // pred_fallthru
          _
        // Predicated region
        $region53: #{tpu_custom_call.1} parent=47 // pred_check
          %p292 = pneg %p67
        $region54: #{tpu_custom_call.1} parent=47 // pred_check_branch
          %294 = sbr.rel (%p292) target = $region56
        $region55: #{tpu_custom_call.1} parent=47 // pred_region
          %295 = dma.done [#allocation6], 1024
        $region56: #{tpu_custom_call.1} parent=47 // pred_fallthru
          _
        // Predicated region
        $region57: #{tpu_custom_call.1} parent=47 // pred_check
          %p296 = pneg %p109
        $region58: #{tpu_custom_call.1} parent=47 // pred_check_branch
          %298 = sbr.rel (%p296) target = $region60
        $region59: #{tpu_custom_call.1} parent=47 // pred_region
          %299 = dma.done [#allocation6], 1024
        $region60: #{tpu_custom_call.1} parent=47 // pred_fallthru
          _
        %s300 = sand.u32 %s33, 1
        %s301 = scalar_lea.sflag [#allocation3], %s300
        %s302 = sand.u32 %s33, 1
        %s303 = smul.addr %s302, 8
        %s304 = scalar_lea.vmem [#allocation2], %s303
        %p305 = pneg %p46
        %p306 = pneg %p43
        %p307 = pneg %p67
        %p308 = pneg %p64
        %p309 = pneg %p88
        %p310 = pneg %p85
        %p311 = pneg %p109
        %p312 = pneg %p106
        %p313 = pneg %p130
        %p314 = pneg %p127
        %p315 = pneg %p151
        %p316 = pneg %p148
        %p317 = pneg %p172
        %p318 = pneg %p169
        %p319 = pneg %p198
        %p320 = pneg %p195
        %s321 = sand.u32 %s185, 1
        %s322 = scalar_lea.sflag [#allocation4], %s321
        %s323 = sand.u32 %s185, 1
        %s324 = smul.addr %s323, 16
        %s325 = scalar_lea.vmem [#allocation8], %s324
        %s326 = smul.u32 2, %s25
        %s327 = smul.u32 2, %s25
        %v329 = vld [vmem:[%s287] sm:$0xf]
        %v330 = vld [vmem:[%s287 + $0x4] sm:$0xf]
        %v331 = vld [vmem:[#allocation5] sm:$0xf]
        %v332 = vld [vmem:[#allocation5 + $0x4] sm:$0xf]
        %v333 = vld [vmem:[#allocation5 + $0x8] sm:$0xf]
        %v334 = vld [vmem:[#allocation5 + $0xc] sm:$0xf]
        %v335 = vld [vmem:[#allocation5 + $0x10] sm:$0xf]
        %v336 = vld [vmem:[#allocation5 + $0x14] sm:$0xf]
        %v337 = vld [vmem:[#allocation5 + $0x18] sm:$0xf]
        %v338 = vld [vmem:[#allocation5 + $0x1c] sm:$0xf]
        %v339 = vld [vmem:[#allocation5 + $0x20] sm:$0xf]
        %v340 = vld [vmem:[#allocation5 + $0x24] sm:$0xf]
        %v341 = vld [vmem:[#allocation5 + $0x28] sm:$0xf]
        %v342 = vld [vmem:[#allocation5 + $0x2c] sm:$0xf]
        %v343 = vld [vmem:[#allocation5 + $0x30] sm:$0xf]
        %v344 = vld [vmem:[#allocation5 + $0x34] sm:$0xf]
        %v345 = vld [vmem:[#allocation5 + $0x38] sm:$0xf]
        %v346 = vld [vmem:[#allocation5 + $0x3c] sm:$0xf]
        %v347 = vld [vmem:[%s2] sm:$0x1]
        %v349 = vlaneseq
        %v350 = vshrl.u32 %v349, 7
        %v351 = vsub.s32 0, %v350
        %v352 = vrot.slane %v347, %v351
        %v356 = vunpack.c.l.b16 %v329
        %v357 = vunpack.c.l.b16 %v330
        %v358 = vpack.c.b16 %v357, %v356
        %v376 = vunpack.c.l.b16 %v331
        %v377 = vunpack.c.l.b16 %v332
        %v378 = vunpack.c.l.b16 %v333
        %v379 = vunpack.c.l.b16 %v334
        %v380 = vunpack.c.l.b16 %v335
        %v381 = vunpack.c.l.b16 %v336
        %v382 = vunpack.c.l.b16 %v337
        %v383 = vunpack.c.l.b16 %v338
        %v384 = vunpack.c.l.b16 %v339
        %v385 = vunpack.c.l.b16 %v340
        %v386 = vunpack.c.l.b16 %v341
        %v387 = vunpack.c.l.b16 %v342
        %v388 = vunpack.c.l.b16 %v343
        %v389 = vunpack.c.l.b16 %v344
        %v390 = vunpack.c.l.b16 %v345
        %v391 = vunpack.c.l.b16 %v346
        %v392 = vpack.c.b16 %v377, %v376
        %v393 = vpack.c.b16 %v379, %v378
        %v394 = vpack.c.b16 %v381, %v380
        %v395 = vpack.c.b16 %v383, %v382
        %v396 = vpack.c.b16 %v385, %v384
        %v397 = vpack.c.b16 %v387, %v386
        %v398 = vpack.c.b16 %v389, %v388
        %v399 = vpack.c.b16 %v391, %v390
        %408 = vmatprep.subr.bf16.mxu0 0
        %409 = vmatpush1.bf16.msra.mxu0 %v399
        %410 = vmatprep.subr.bf16.mxu0 0
        %411 = vmatpush1.bf16.msra.mxu0 %v398
        %412 = vmatprep.subr.bf16.mxu0 0
        %413 = vmatpush1.bf16.msra.mxu0 %v397
        %414 = vmatprep.subr.bf16.mxu0 0
        %415 = vmatpush1.bf16.msra.mxu0 %v396
        %416 = vmatprep.subr.bf16.mxu0 0
        %417 = vmatpush1.bf16.msra.mxu0 %v395
        %418 = vmatprep.subr.bf16.mxu0 0
        %419 = vmatpush1.bf16.msra.mxu0 %v394
        %420 = vmatprep.subr.bf16.mxu0 0
        %421 = vmatpush1.bf16.msra.mxu0 %v393
        %422 = vmatprep.subr.bf16.mxu0 0
        %423 = vmatpush1.bf16.msra.mxu0 %v392
        %424 = vmatprep.subr.bf16.mxu0 0
        %425 = vmatpush2.bf16.msra.mxu0 0
        %426 = vmatprep.subr.bf16.mxu0 0
        %427 = vmatpush2.bf16.msra.mxu0 0
        %428 = vmatprep.subr.bf16.mxu0 0
        %429 = vmatpush2.bf16.msra.mxu0 0
        %430 = vmatprep.subr.bf16.mxu0 0
        %431 = vmatpush2.bf16.msra.mxu0 0
        %432 = vmatprep.subr.bf16.mxu0 0
        %433 = vmatpush2.bf16.msra.mxu0 0
        %434 = vmatprep.subr.bf16.mxu0 0
        %435 = vmatpush2.bf16.msra.mxu0 0
        %436 = vmatprep.subr.bf16.mxu0 0
        %437 = vmatpush2.bf16.msra.mxu0 0
        %438 = vmatprep.subr.bf16.mxu0 0
        %439 = vmatpush2.bf16.msra.mxu0 0
        %440 = vmatprep.mubr.bf16.mxu0 0
        %441 = vmatmul.mubr.bf16.gmra.mxu0 %v358
        %v442 = vpop.f32.mrf.mxu0
        %v443 = vadd.f32 %v352, %v442
        %v444 = vpop.f32.mrf.mxu0
        %v445 = vpop.f32.mrf.mxu0
        %v446 = vadd.f32 %v352, %v445
        %v447 = vpop.f32.mrf.mxu0
        %448 = vdwg.mxu0
        %v449 = vmax.f32 %v443, 0.0
        %v450 = vmax.f32 %v446, 0.0
        %v451 = vpack.c.bf16 %v450, %v449
        %v452 = vld [vmem:[#allocation7] sm:$0xf]
        %v453 = vld [vmem:[#allocation7 + $0x4] sm:$0xf]
        %v454 = vld [vmem:[#allocation7 + $0x8] sm:$0xf]
        %v455 = vld [vmem:[#allocation7 + $0xc] sm:$0xf]
        %v456 = vld [vmem:[#allocation7 + $0x10] sm:$0xf]
        %v457 = vld [vmem:[#allocation7 + $0x14] sm:$0xf]
        %v458 = vld [vmem:[#allocation7 + $0x18] sm:$0xf]
        %v459 = vld [vmem:[#allocation7 + $0x1c] sm:$0xf]
        %v460 = vld [vmem:[#allocation7 + $0x20] sm:$0xf]
        %v461 = vld [vmem:[#allocation7 + $0x24] sm:$0xf]
        %v462 = vld [vmem:[#allocation7 + $0x28] sm:$0xf]
        %v463 = vld [vmem:[#allocation7 + $0x2c] sm:$0xf]
        %v464 = vld [vmem:[#allocation7 + $0x30] sm:$0xf]
        %v465 = vld [vmem:[#allocation7 + $0x34] sm:$0xf]
        %v466 = vld [vmem:[#allocation7 + $0x38] sm:$0xf]
        %v467 = vld [vmem:[#allocation7 + $0x3c] sm:$0xf]
        %v468 = vld [vmem:[%s4] sm:$0x1]
        %v470 = vlaneseq
        %v471 = vshrl.u32 %v470, 7
        %v472 = vsub.s32 0, %v471
        %v473 = vrot.slane %v468, %v472
        %v491 = vunpack.c.l.b16 %v452
        %v492 = vunpack.c.l.b16 %v453
        %v493 = vunpack.c.l.b16 %v454
        %v494 = vunpack.c.l.b16 %v455
        %v495 = vunpack.c.l.b16 %v456
        %v496 = vunpack.c.l.b16 %v457
        %v497 = vunpack.c.l.b16 %v458
        %v498 = vunpack.c.l.b16 %v459
        %v499 = vunpack.c.l.b16 %v460
        %v500 = vunpack.c.l.b16 %v461
        %v501 = vunpack.c.l.b16 %v462
        %v502 = vunpack.c.l.b16 %v463
        %v503 = vunpack.c.l.b16 %v464
        %v504 = vunpack.c.l.b16 %v465
        %v505 = vunpack.c.l.b16 %v466
        %v506 = vunpack.c.l.b16 %v467
        %v507 = vpack.c.b16 %v492, %v491
        %v508 = vpack.c.b16 %v494, %v493
        %v509 = vpack.c.b16 %v496, %v495
        %v510 = vpack.c.b16 %v498, %v497
        %v511 = vpack.c.b16 %v500, %v499
        %v512 = vpack.c.b16 %v502, %v501
        %v513 = vpack.c.b16 %v504, %v503
        %v514 = vpack.c.b16 %v506, %v505
        %523 = vmatprep.subr.bf16.mxu0 0
        %524 = vmatpush1.bf16.msra.mxu0 %v514
        %525 = vmatprep.subr.bf16.mxu0 0
        %526 = vmatpush1.bf16.msra.mxu0 %v513
        %527 = vmatprep.subr.bf16.mxu0 0
        %528 = vmatpush1.bf16.msra.mxu0 %v512
        %529 = vmatprep.subr.bf16.mxu0 0
        %530 = vmatpush1.bf16.msra.mxu0 %v511
        %531 = vmatprep.subr.bf16.mxu0 0
        %532 = vmatpush1.bf16.msra.mxu0 %v510
        %533 = vmatprep.subr.bf16.mxu0 0
        %534 = vmatpush1.bf16.msra.mxu0 %v509
        %535 = vmatprep.subr.bf16.mxu0 0
        %536 = vmatpush1.bf16.msra.mxu0 %v508
        %537 = vmatprep.subr.bf16.mxu0 0
        %538 = vmatpush1.bf16.msra.mxu0 %v507
        %539 = vmatprep.subr.bf16.mxu0 0
        %540 = vmatpush2.bf16.msra.mxu0 0
        %541 = vmatprep.subr.bf16.mxu0 0
        %542 = vmatpush2.bf16.msra.mxu0 0
        %543 = vmatprep.subr.bf16.mxu0 0
        %544 = vmatpush2.bf16.msra.mxu0 0
        %545 = vmatprep.subr.bf16.mxu0 0
        %546 = vmatpush2.bf16.msra.mxu0 0
        %547 = vmatprep.subr.bf16.mxu0 0
        %548 = vmatpush2.bf16.msra.mxu0 0
        %549 = vmatprep.subr.bf16.mxu0 0
        %550 = vmatpush2.bf16.msra.mxu0 0
        %551 = vmatprep.subr.bf16.mxu0 0
        %552 = vmatpush2.bf16.msra.mxu0 0
        %553 = vmatprep.subr.bf16.mxu0 0
        %554 = vmatpush2.bf16.msra.mxu0 0
        %555 = vmatprep.mubr.bf16.mxu0 0
        %556 = vmatmul.mubr.bf16.gmra.mxu0 %v451
        %v557 = vpop.f32.mrf.mxu0
        %v558 = vadd.f32 %v473, %v557
        %v559 = vpop.f32.mrf.mxu0
        %v560 = vpop.f32.mrf.mxu0
        %v561 = vadd.f32 %v473, %v560
        %v562 = vpop.f32.mrf.mxu0
        %563 = vdwg.mxu0
        %v564 = vmax.f32 %v558, 0.0
        %v565 = vmax.f32 %v561, 0.0
        %v566 = vld [vmem:[%s5] sm:$0x1]
        %v568 = vlaneseq
        %v569 = vshrl.u32 %v568, 7
        %v570 = vsub.s32 0, %v569
        %v571 = vrot.slane %v566, %v570
        %v573 = vmul.f32 %v564, %v571
        %v574 = vmul.f32 %v565, %v571
        %575 = vadd.xlane.f32.xlu0 %v573
        %v576 = vpop.xlane.xlu0 %575
        %577 = vadd.xlane.f32.xlu0 %v574
        %v578 = vpop.xlane.xlu0 %577
        %v579 = vld [vmem:[%s6] sm:$0x1]
        %v581 = vlaneseq
        %v582 = vshrl.u32 %v581, 7
        %v583 = vsub.s32 0, %v582
        %v584 = vrot.slane %v579, %v583
        %v586 = vadd.f32 %v576, %v584
        %v587 = vadd.f32 %v578, %v584
        %588 = vst [vmem:[%s325] sm:$0xff] %v586
        %589 = vst [vmem:[%s325 + $0x8] sm:$0xff] %v587
        %s590 = sand.u32 %s185, 1
        %s591 = scalar_lea.sflag [#allocation4], %s590
        %s592 = sand.u32 %s185, 1
        %s593 = smul.addr %s592, 16
        %s594 = scalar_lea.vmem [#allocation8], %s593
        // Predicated region
        $region61: #{tpu_custom_call.1} parent=47 // pred_check
          %p595 = pneg %p195
        $region62: #{tpu_custom_call.1} parent=47 // pred_check_branch
          %597 = sbr.rel (%p595) target = $region64
        $region63: #{tpu_custom_call.1} parent=47 // pred_region
          %s598 = smul.u32 2, %s25
          %s600 = ssub.s32 256, 256
          %601 = vsyncadd %s591, %s600
          %s602 = smul.addr %s598, 128
          %s603 = scalar_lea.hbm %s7, %s602
          %s604 = sshll.u32 %s594, 4
          %s605 = int_to_ptr.vmem [resolvable:$true] %s604
          %610 = dma.vmem_to_hbm [thread:$0]  %s605, 256, %s603, %s591, 128, 128, 8
        $region64: #{tpu_custom_call.1} parent=47 // pred_fallthru
          _
      $region48: #{tpu_custom_call.1} parent=5 // pred_fallthru
        _
      %p611 = scmp.le.s32.totalorder 2, %s20
      // Predicated region
      $region65: #{tpu_custom_call.1} parent=5 // pred_check
        %p612 = pneg %p611
      $region66: #{tpu_custom_call.1} parent=5 // pred_check_branch
        %614 = sbr.rel (%p612) target = $region68
      $region67: #{tpu_custom_call.1} parent=5 // pred_region
        %s615 = ssub.s32 %s20, 2
        // Predicated region
        $region69: #{tpu_custom_call.1} parent=67 // pred_check
          %p616 = pneg %p201
        $region70: #{tpu_custom_call.1} parent=67 // pred_check_branch
          %618 = sbr.rel (%p616) target = $region72
        $region71: #{tpu_custom_call.1} parent=67 // pred_region
          %s619 = sand.u32 %s186, 1
          %s620 = scalar_lea.sflag [#allocation4], %s619
          %s621 = sand.u32 %s186, 1
          %s622 = smul.addr %s621, 16
          %s623 = scalar_lea.vmem [#allocation8], %s622
          %624 = dma.done %s620, 256
        $region72: #{tpu_custom_call.1} parent=67 // pred_fallthru
          _
      $region68: #{tpu_custom_call.1} parent=5 // pred_fallthru
        _
    $region6: #{tpu_custom_call.1} parent=1 // loop_footer
      %s24 = sadd.s32 1, %s20
    $region7: #{tpu_custom_call.1} parent=1 // loop_footer_branch
      %19 = sbr.rel target = $region3
    $region8: #{tpu_custom_call.1} parent=1 // loop_exit
      _
    %625 = vsyncpa [#allocation3], 1
    %s626 = scalar_lea.sflag [#allocation3], 1
    %627 = vsyncpa %s626, 1
    %628 = vsyncpa [#allocation6], 1
    %629 = vsyncpa [#allocation4], 1
    %s630 = scalar_lea.sflag [#allocation4], 1
    %631 = vsyncpa %s630, 1

</llo_original>
